<compile_context>
chip_gen: v5e
topology: v5e:2x2
jax: 0.10.0
libtpu: 0.0.40
codegen_flags: <defaults>
</compile_context>

<pallas_src>
import jax
import jax.numpy as jnp
from jax.experimental import pallas as pl
from jax.experimental.pallas import tpu as pltpu


def _round_up(x, m):
    return ((x + m - 1) // m) * m


def _vmem_budget_bytes():
    """Generation-aware VMEM budget: 75% of physical per-core VMEM (leaves headroom
    for Mosaic internal scratch). Falls back to a v7x-safe 48 MiB if the query fails."""
    phys = None
    try:
        info = pltpu.get_tpu_info()
        phys = getattr(info, "vmem_capacity_bytes", None)
    except Exception:
        phys = None
    if not phys:
        phys = 64 * 1024 * 1024  # v7x per-TC physical (most restrictive)
    return int(phys * 3 // 4)


def _choose_weight_tiling(D, rows, x_bytes, out_bytes, budget):
    """Return (tile_cols, weight_resident).

    Prefer a single VMEM-resident bf16 weight block (tn = D, constant index_map) when it
    fits the budget alongside a >=256-row tile; otherwise stream 256-aligned (then
    128-aligned) column slabs sized against the budget."""
    per_row_full = 2 * D * x_bytes + 2 * D * out_bytes + D * 2  # x, out (tn=D), normed
    if D % 128 == 0:
        w_bytes = 2 * D * D * 2                                  # bf16, double-buffered
        tr_min = min(256, _round_up(rows, 8))
        if w_bytes + tr_min * per_row_full + 2 * D * 4 <= budget:
            return D, True
    cap = max(budget // 6, 2 * D * 128 * 2)                      # slab budget (2 bufs)
    for align in (256, 128):                                     # fill the 256x256 MXU
        if D % align:
            continue
        for k in range(D // align, 0, -1):
            cand = align * k
            if D % cand == 0 and 2 * D * cand * 2 <= cap:
                return cand, False
    return D, False                                              # D not lane-aligned


def _pick_tile_rows(rows, D, tn, x_bytes, out_bytes, budget):
    """Largest row tile that fits the VMEM budget (<=1024, 256-aligned when big), while
    keeping >= 2 row tiles so both v7x TensorCores get work on the 'parallel' axis."""
    fixed = 2 * D * tn * 2 + 2 * tn * 4                          # W slabs + bias
    per_row = 2 * D * x_bytes + 2 * tn * out_bytes + D * 2       # x, out, normed scratch
    avail = max(budget - fixed, per_row * 8)
    tr = min(1024, avail // per_row, _round_up(rows, 8))
    if tr >= 256:
        tr = (tr // 256) * 256
    else:
        tr = max(8, (tr // 8) * 8)
    while rows > 8 and pl.cdiv(rows, tr) < 2 and tr > 8:         # feed both v7x TCs
        tr = max(8, _round_up(tr // 2, 8))
    return int(tr)


def _sublayer_connection_kernel(d_model, tile_cols, eps):
    inv_n = 1.0 / d_model
    inv_nm1 = 1.0 / max(d_model - 1, 1)  # torch.Tensor.std -> unbiased (N-1) divisor

    def kernel(x_ref, w_ref, b_ref, o_ref, normed_ref):
        j = pl.program_id(1)

        # ---- LayerNorm once per row tile (j == 0), reused across all column tiles ----
        # gamma/beta are folded into W/bias in the wrapper, so only (x - mean) * inv_std
        # is computed here. Two-pass variance: tile is resident, so it's nearly free and
        # avoids catastrophic cancellation of the single-pass form.
        @pl.when(j == 0)
        def _():
            x = x_ref[...].astype(jnp.float32)                        # (TR, D)
            mean = jnp.sum(x, axis=-1, keepdims=True) * inv_n
            xc = x - mean
            var = jnp.sum(xc * xc, axis=-1, keepdims=True) * inv_nm1
            # torch semantics: (x - mean) / (std + eps); divide -> EUP reciprocal
            inv_std = pl.reciprocal(jnp.sqrt(var) + eps, approx=True)
            normed_ref[...] = (xc * inv_std).astype(normed_ref.dtype)  # bf16 for the MXU

        # ---- sublayer: Linear(d_model, d_model) on a (D, TN) weight slab ----
        sub = jnp.dot(normed_ref[...], w_ref[...],
                      preferred_element_type=jnp.float32)             # (TR, TN) f32
        sub = sub + b_ref[...]

        # ---- dropout (eval mode -> identity) + residual ----
        if tile_cols == d_model:
            x_cols = x_ref[...].astype(jnp.float32)
        else:
            col0 = pl.multiple_of(j * tile_cols, tile_cols)
            x_cols = x_ref[:, pl.ds(col0, tile_cols)].astype(jnp.float32)
        o_ref[...] = (x_cols + sub).astype(o_ref.dtype)

    return kernel


def sublayer_connection(x, w, b, gamma, beta, *, eps=1e-6, dropout=0.0,
                        tile_rows=None, tile_cols=None):
    """x: [B, S, D]; w: [D, D]; b, gamma, beta: [D]. Returns [B, S, D].

    Pass bf16 `x` to get the bf16 activation path (halves x/y HBM traffic and the
    largest VMEM buffers); LN stats and the residual add stay in f32 inside the kernel.
    """
    del dropout  # eval-mode identity; see TODO at top of file
    B, S, D = x.shape
    rows = B * S
    x_bytes = jnp.dtype(x.dtype).itemsize
    out_bytes = x_bytes

    budget = _vmem_budget_bytes()

    if tile_cols is not None:
        tn = tile_cols
        assert D % tn == 0, "tile_cols must divide d_model"
        w_resident = (tn == D)
    else:
        tn, w_resident = _choose_weight_tiling(D, rows, x_bytes, out_bytes, budget)

    if tile_rows is not None:
        tr = max(8, _round_up(min(tile_rows, _round_up(rows, 8)), 8))
    else:
        tr = _pick_tile_rows(rows, D, tn, x_bytes, out_bytes, budget)

    # Fold the LayerNorm affine into the linear layer (exact algebra):
    #   gamma*(x-mean)/(std+eps) + beta  ->  W' = gamma[:,None]*W,  b' = beta @ W + b
    wf = w.astype(jnp.float32)
    w_fold = (gamma.astype(jnp.float32)[:, None] * wf).astype(jnp.bfloat16)
    b_fold = (beta.astype(jnp.float32) @ wf + b.astype(jnp.float32)).reshape(1, D)

    x2 = x.reshape(rows, D)   # no host-side padding: ragged last row tile is clipped

    grid = (pl.cdiv(rows, tr), D // tn)
    w_index = (lambda i, j: (0, 0)) if w_resident else (lambda i, j: (0, j))

    out = pl.pallas_call(
        _sublayer_connection_kernel(D, tn, eps),
        out_shape=jax.ShapeDtypeStruct((rows, D), x.dtype),
        grid_spec=pltpu.PrefetchScalarGridSpec(
            num_scalar_prefetch=0,
            grid=grid,
            in_specs=[
                pl.BlockSpec((tr, D), lambda i, j: (i, 0)),   # x rows (full D: LN + residual)
                pl.BlockSpec((D, tn), w_index),               # weight: resident or col slab
                pl.BlockSpec((1, tn), lambda i, j: (0, j)),   # folded bias slab
            ],
            out_specs=pl.BlockSpec((tr, tn), lambda i, j: (i, j)),
            scratch_shapes=[pltpu.VMEM((tr, D), jnp.bfloat16)],  # normed rows, reused over j
        ),
        compiler_params=pltpu.CompilerParams(
            dimension_semantics=("parallel", "arbitrary"),
            vmem_limit_bytes=int(budget),
        ),
    )(x2, w_fold, b_fold)

    return out.reshape(B, S, D)


def _reference(x, w, b, gamma, beta, eps=1e-6):
    xf = x.astype(jnp.float32)
    mean = jnp.mean(xf, axis=-1, keepdims=True)
    std = jnp.std(xf, axis=-1, keepdims=True, ddof=1)
    normed = gamma * (xf - mean) / (std + eps) + beta
    sub = normed @ w.astype(jnp.float32) + b
    return (xf + sub).astype(x.dtype)


if __name__ == "__main__":
    # Small but lane-dense demo shapes (D multiple of 128 keeps stores unmasked).
    B, S, D = 2, 8, 128
    key = jax.random.PRNGKey(0)
    kx, kw, kb = jax.random.split(key, 3)

    x = jax.random.normal(kx, (B, S, D), dtype=jnp.float32)

    # Parameter init mirroring SublayerConnection.__init__:
    #   LayerNorm: a_2 = ones(D), b_2 = zeros(D); sublayer Linear(D, D): small random w, b
    gamma = jnp.ones((D,), jnp.float32)
    beta = jnp.zeros((D,), jnp.float32)
    w = jax.random.normal(kw, (D, D), dtype=jnp.float32) * 0.05
    b = jax.random.normal(kb, (D,), dtype=jnp.float32) * 0.01

    y = jax.block_until_ready(sublayer_connection(x, w, b, gamma, beta))
    y_ref = _reference(x, w, b, gamma, beta)
    assert y.shape == (B, S, D)
    # bf16 MXU feed + approx reciprocal -> modest tolerance vs pure-f32 reference
    assert jnp.allclose(y, y_ref, atol=2e-2, rtol=2e-2), "mismatch vs reference"

    # Ragged row count exercises the pad-free clipped last tile (rows = 140, tr = 64).
    x3 = jax.random.normal(kx, (2, 70, D), dtype=jnp.float32)
    y3 = jax.block_until_ready(sublayer_connection(x3, w, b, gamma, beta, tile_rows=64))
    y3_ref = _reference(x3, w, b, gamma, beta)
    assert jnp.allclose(y3, y3_ref, atol=2e-2, rtol=2e-2), "mismatch vs reference (ragged)"

    # bf16 activation path (caller passes bf16 x; output stays bf16).
    xb = x.astype(jnp.bfloat16)
    yb = jax.block_until_ready(sublayer_connection(xb, w, b, gamma, beta))
    yb_ref = _reference(xb, w, b, gamma, beta)
    assert yb.dtype == jnp.bfloat16
    assert jnp.allclose(yb.astype(jnp.float32), yb_ref.astype(jnp.float32),
                        atol=1e-1, rtol=1e-1), "mismatch vs reference (bf16)"

    print("KERNEL_OK")
</pallas_src>

<mosaic_0001>
module attributes {stable_mosaic.version = 11 : i64} {
  func.func @kernel(%arg0: i32, %arg1: i32, %arg2: memref<8x128xf32, #tpu.memory_space<vmem>>, %arg3: memref<128x128xbf16, #tpu.memory_space<vmem>>, %arg4: memref<1x128xf32, #tpu.memory_space<vmem>>, %arg5: memref<8x128xf32, #tpu.memory_space<vmem>>, %arg6: memref<8x128xbf16, #tpu.memory_space<vmem>>) attributes {dimension_semantics = [#tpu.dimension_semantics<parallel>, #tpu.dimension_semantics<arbitrary>], iteration_bounds = array<i64: 2, 1>, scalar_prefetch = 0 : i64, scratch_operands = 1 : i64, tpu.core_type = #tpu.core_type<tc>, window_params = [{transform_indices = @transform_0, window_bounds = array<i64: 8, 128>}, {pipeline_mode = #tpu.pipeline_mode<synchronous>, transform_indices = @transform_1, window_bounds = array<i64: 128, 128>}, {transform_indices = @transform_2, window_bounds = array<i64: 1, 128>}, {transform_indices = @transform_3, window_bounds = array<i64: 8, 128>}]} {
    %c0_i32 = arith.constant 0 : i32
    %0 = arith.cmpi eq, %arg1, %c0_i32 : i32
    %1 = arith.extui %0 : i1 to i32
    %c0_i32_0 = arith.constant 0 : i32
    %2 = arith.cmpi ne, %1, %c0_i32_0 : i32
    scf.if %2 {
      %c0_10 = arith.constant 0 : index
      %c0_11 = arith.constant 0 : index
      %12 = vector.load %arg2[%c0_10, %c0_11] : memref<8x128xf32, #tpu.memory_space<vmem>>, vector<8x128xf32>
      %cst_12 = arith.constant dense<0.000000e+00> : vector<8xf32>
      %13 = vector.multi_reduction <add>, %12, %cst_12 [1] : vector<8x128xf32> to vector<8xf32>
      %14 = vector.shape_cast %13 : vector<8xf32> to vector<8x1xf32>
      %cst_13 = arith.constant 7.812500e-03 : f32
      %15 = vector.broadcast %cst_13 : f32 to vector<8x1xf32>
      %16 = arith.mulf %14, %15 : vector<8x1xf32>
      %17 = vector.broadcast %16 : vector<8x1xf32> to vector<8x128xf32>
      %18 = arith.subf %12, %17 : vector<8x128xf32>
      %19 = arith.mulf %18, %18 : vector<8x128xf32>
      %cst_14 = arith.constant dense<0.000000e+00> : vector<8xf32>
      %20 = vector.multi_reduction <add>, %19, %cst_14 [1] : vector<8x128xf32> to vector<8xf32>
      %21 = vector.shape_cast %20 : vector<8xf32> to vector<8x1xf32>
      %cst_15 = arith.constant 0.00787401571 : f32
      %22 = vector.broadcast %cst_15 : f32 to vector<8x1xf32>
      %23 = arith.mulf %21, %22 : vector<8x1xf32>
      %24 = math.sqrt %23 : vector<8x1xf32>
      %cst_16 = arith.constant 9.99999997E-7 : f32
      %25 = vector.broadcast %cst_16 : f32 to vector<8x1xf32>
      %26 = arith.addf %24, %25 : vector<8x1xf32>
      %27 = tpu.reciprocal %26 {approx = true} : vector<8x1xf32> -> vector<8x1xf32>
      %28 = vector.broadcast %27 : vector<8x1xf32> to vector<8x128xf32>
      %29 = arith.mulf %18, %28 : vector<8x128xf32>
      %30 = arith.truncf %29 : vector<8x128xf32> to vector<8x128xbf16>
      %c0_17 = arith.constant 0 : index
      %c0_18 = arith.constant 0 : index
      %31 = vector.load %arg6[%c0_17, %c0_18] : memref<8x128xbf16, #tpu.memory_space<vmem>>, vector<8x128xbf16>
      tpu.vector_store %arg6[%c0_17, %c0_18], %30 {strides = array<i32>} : memref<8x128xbf16, #tpu.memory_space<vmem>>, vector<8x128xbf16>,
    } else {
    }
    %c0 = arith.constant 0 : index
    %c0_1 = arith.constant 0 : index
    %3 = vector.load %arg6[%c0, %c0_1] : memref<8x128xbf16, #tpu.memory_space<vmem>>, vector<8x128xbf16>
    %c0_2 = arith.constant 0 : index
    %c0_3 = arith.constant 0 : index
    %4 = vector.load %arg3[%c0_2, %c0_3] : memref<128x128xbf16, #tpu.memory_space<vmem>>, vector<128x128xbf16>
    %cst = arith.constant dense<0.000000e+00> : vector<8x128xf32>
    %5 = tpu.matmul %3, %4, %cst {dimension_numbers = #tpu.dot_dimension_numbers<[1], [0], [0], [1], [0, 0, 1, 1], [], []>} : vector<8x128xbf16>, vector<128x128xbf16>, vector<8x128xf32> -> vector<8x128xf32>
    %c0_4 = arith.constant 0 : index
    %c0_5 = arith.constant 0 : index
    %6 = vector.load %arg4[%c0_4, %c0_5] : memref<1x128xf32, #tpu.memory_space<vmem>>, vector<1x128xf32>
    %7 = vector.broadcast %6 : vector<1x128xf32> to vector<8x128xf32>
    %8 = arith.addf %5, %7 : vector<8x128xf32>
    %c0_6 = arith.constant 0 : index
    %c0_7 = arith.constant 0 : index
    %9 = vector.load %arg2[%c0_6, %c0_7] : memref<8x128xf32, #tpu.memory_space<vmem>>, vector<8x128xf32>
    %10 = arith.addf %9, %8 : vector<8x128xf32>
    %c0_8 = arith.constant 0 : index
    %c0_9 = arith.constant 0 : index
    %11 = vector.load %arg5[%c0_8, %c0_9] : memref<8x128xf32, #tpu.memory_space<vmem>>, vector<8x128xf32>
    tpu.vector_store %arg5[%c0_8, %c0_9], %10 {strides = array<i32>} : memref<8x128xf32, #tpu.memory_space<vmem>>, vector<8x128xf32>,
    return
  }
  func.func @transform_0(%arg0: i32, %arg1: i32) -> (i32, i32) {
    %c0_i32 = arith.constant 0 : i32
    %c0_i32_0 = arith.constant 0 : i32
    return %arg0, %c0_i32 : i32, i32
  }
  func.func @transform_1(%arg0: i32, %arg1: i32) -> (i32, i32) {
    %c0_i32 = arith.constant 0 : i32
    %c0_i32_0 = arith.constant 0 : i32
    %c0_i32_1 = arith.constant 0 : i32
    return %c0_i32, %c0_i32_0 : i32, i32
  }
  func.func @transform_2(%arg0: i32, %arg1: i32) -> (i32, i32) {
    %c0_i32 = arith.constant 0 : i32
    %c0_i32_0 = arith.constant 0 : i32
    return %c0_i32, %arg1 : i32, i32
  }
  func.func @transform_3(%arg0: i32, %arg1: i32) -> (i32, i32) {
    %c0_i32 = arith.constant 0 : i32
    return %arg0, %arg1 : i32, i32
  }
}

</mosaic_0001>

<llo_original>
// kernel: tpu_custom_call.1
$region0: #{tpu_custom_call.1}
  #allocation0 [shape = 'u32[]', space=smem, size = 0x4, offset = 0x4, fixed_abs, tag = 'smem constant byte address 0x4 - core index']
  #allocation1 [shape = 'u32[72,128]{1,0:T(1,128)}', space=vmem, size = 0x9000, scoped, tag = 'internal scratch']
  #allocation2 [shape = 'bf16[8,128]{1,0:T(8,128)(2,1)}', space=vmem, size = 0x800, scoped, tag = 'scratch operand']
  %s0 = inlined_call_operand.hbm [shape: f32[16,128], index: 0, kind: input, shape index: {}]
  %s1 = inlined_call_operand.hbm [shape: bf16[128,128], index: 1, kind: input, shape index: {}]
  %s2 = inlined_call_operand.vmem [shape: f32[1,128], index: 2, kind: input, shape index: {}]
  %s3 = inlined_call_operand.hbm [shape: f32[16,128], index: 3, kind: output, shape index: {}]
  %s4 = sld [smem:[#allocation0]]
  $region57: #{tpu_custom_call.1} parent=0
    _
  %s6 = ssub.s32 1, %s4
  %s7 = scalar_select 0, %s6, %s4
  $region1: #{tpu_custom_call.1} parent=0
    #allocation3 [shape = 'u8[8192]{0}', space=vmem, size = 0x2000, scoped, tag = 'input window, operand 0']
    #allocation4 [shape = 's32[2]{0}', space=sflag, size = 0x8, scoped, tag = 'scoped memory for tpu_custom_call.1']
    #allocation5 [shape = 's32[2]{0}', space=sflag, size = 0x8, scoped, tag = 'scoped memory for tpu_custom_call.1']
    #allocation6 [shape = 'u8[32768]{0}', space=vmem, size = 0x8000, scoped, tag = 'input window, operand 1, single buffered']
    #allocation7 [shape = 's32[1]{0}', space=sflag, size = 0x4, scoped, tag = 'scoped memory for tpu_custom_call.1']
    #allocation8 [shape = 'u8[8192]{0}', space=vmem, size = 0x2000, scoped, tag = 'output window, operand 0']
    %8 = vsyncpa [#allocation4], 0
    %s9 = scalar_lea.sflag [#allocation4], 1
    %10 = vsyncpa %s9, 0
    %11 = vsyncpa [#allocation7], 0
    %12 = vsyncpa [#allocation5], 0
    %s13 = scalar_lea.sflag [#allocation5], 1
    %14 = vsyncpa %s13, 0
    loop: start=0, step=1, limit=4
    $region2: #{tpu_custom_call.1} parent=1 // loop_pre_header
      _
    $region3: #{tpu_custom_call.1} parent=1 // loop_header
      %s16 = sphi 0, %s20
      %p17 = scmp.ge.s32.totalorder %s16, 4
      %s23 = sphi 0, %s35
      %s24 = sphi 0, %s31
      %s25 = sphi 0, %s23
      %s26 = sphi 0, %s24
      %s27 = sphi 0, %s25
      %s28 = sphi 0, %s26
      %s38 = sphi 0, %s40
      %s41 = sphi 0, %s38
      %s42 = sphi 0, %s41
      %s58 = sphi 0, %s42
      %s62 = sphi 0, %s62
      %s64 = sphi 0, %s62
      %s65 = sphi 0, %s64
      %s79 = sphi 0, %s65
      %s85 = sphi 0, %s87
      %s88 = sphi 0, %s85
      %s89 = sphi 0, %s88
      %s105 = sphi 0, %s89
      %s113 = sphi 0, %s115
      %s116 = sphi 0, %s113
      %s117 = sphi 0, %s116
      %s133 = sphi 0, %s117
    $region4: #{tpu_custom_call.1} parent=1 // loop_header_branch
      %19 = sbr.rel (%p17) target = $region8
    $region5: #{tpu_custom_call.1} parent=1 // loop_body
      %s21 = ssub.s32 %s16, 1
      %s22 = ssub.s32 %s16, 2
      %s29 = sadd.s32 1, %s24
      %p30 = scmp.ge.s32.totalorder %s29, 1
      %s31 = scalar_select %p30, 0, %s29
      %s32 = sadd.s32 1, %s23
      %s33 = scalar_select %p30, %s32, %s23
      %p34 = scmp.ge.s32.totalorder %s33, 2
      %s35 = scalar_select %p34, 0, %s33
      %s36 = ssub.s32 %s23, %s35
      %p37 = scmp.eq.s32.totalorder %s36, 0
      %s39 = sadd.s32 %s38, 1
      %s40 = scalar_select %p37, %s38, %s39
      %p43 = pneg %p37
      %p44 = scmp.eq.s32.totalorder %s16, 1
      %p45 = por %p43, %p44
      %p46 = scmp.ne.s32.totalorder %s38, %s41
      %p47 = scmp.eq.s32.totalorder %s16, 0
      %p48 = por %p46, %p47
      %p49 = scmp.ne.s32.totalorder %s38, %s41
      %p50 = scmp.eq.s32.totalorder %s21, 1
      %p51 = por %p49, %p50
      %p52 = scmp.ne.s32.totalorder %s41, %s42
      %p53 = scmp.eq.s32.totalorder %s21, 0
      %p54 = por %p52, %p53
      %p55 = scmp.ne.s32.totalorder %s41, %s42
      %p56 = scmp.eq.s32.totalorder %s22, 1
      %p57 = por %p55, %p56
      %p59 = scmp.ne.s32.totalorder %s42, %s58
      %p60 = scmp.eq.s32.totalorder %s22, 0
      %p61 = por %p59, %p60
      %s63 = sadd.s32 %s62, 1
      %p66 = scmp.eq.s32.totalorder %s16, 1
      %p67 = scmp.ne.s32.totalorder %s62, %s64
      %p68 = scmp.eq.s32.totalorder %s16, 0
      %p69 = por %p67, %p68
      %p70 = scmp.ne.s32.totalorder %s62, %s64
      %p71 = scmp.eq.s32.totalorder %s21, 1
      %p72 = por %p70, %p71
      %p73 = scmp.ne.s32.totalorder %s64, %s65
      %p74 = scmp.eq.s32.totalorder %s21, 0
      %p75 = por %p73, %p74
      %p76 = scmp.ne.s32.totalorder %s64, %s65
      %p77 = scmp.eq.s32.totalorder %s22, 1
      %p78 = por %p76, %p77
      %p80 = scmp.ne.s32.totalorder %s65, %s79
      %p81 = scmp.eq.s32.totalorder %s22, 0
      %p82 = por %p80, %p81
      %s83 = ssub.s32 %s24, %s31
      %p84 = scmp.eq.s32.totalorder %s83, 0
      %s86 = sadd.s32 %s85, 1
      %s87 = scalar_select %p84, %s85, %s86
      %p90 = pneg %p84
      %p91 = scmp.eq.s32.totalorder %s16, 1
      %p92 = por %p90, %p91
      %p93 = scmp.ne.s32.totalorder %s85, %s88
      %p94 = scmp.eq.s32.totalorder %s16, 0
      %p95 = por %p93, %p94
      %p96 = scmp.ne.s32.totalorder %s85, %s88
      %p97 = scmp.eq.s32.totalorder %s21, 1
      %p98 = por %p96, %p97
      %p99 = scmp.ne.s32.totalorder %s88, %s89
      %p100 = scmp.eq.s32.totalorder %s21, 0
      %p101 = por %p99, %p100
      %p102 = scmp.ne.s32.totalorder %s88, %s89
      %p103 = scmp.eq.s32.totalorder %s22, 1
      %p104 = por %p102, %p103
      %p106 = scmp.ne.s32.totalorder %s89, %s105
      %p107 = scmp.eq.s32.totalorder %s22, 0
      %p108 = por %p106, %p107
      %s109 = ssub.s32 %s23, %s35
      %s110 = ssub.s32 %s24, %s31
      %s111 = sor.u32 %s109, %s110
      %p112 = scmp.eq.s32.totalorder %s111, 0
      %s114 = sadd.s32 %s113, 1
      %s115 = scalar_select %p112, %s113, %s114
      %p118 = pneg %p112
      %p119 = scmp.eq.s32.totalorder %s16, 1
      %p120 = por %p118, %p119
      %p121 = scmp.ne.s32.totalorder %s113, %s116
      %p122 = scmp.eq.s32.totalorder %s16, 0
      %p123 = por %p121, %p122
      %p124 = scmp.ne.s32.totalorder %s113, %s116
      %p125 = scmp.eq.s32.totalorder %s21, 1
      %p126 = por %p124, %p125
      %p127 = scmp.ne.s32.totalorder %s116, %s117
      %p128 = scmp.eq.s32.totalorder %s21, 0
      %p129 = por %p127, %p128
      %p130 = scmp.ne.s32.totalorder %s116, %s117
      %p131 = scmp.eq.s32.totalorder %s22, 1
      %p132 = por %p130, %p131
      %p134 = scmp.ne.s32.totalorder %s117, %s133
      %p135 = scmp.eq.s32.totalorder %s22, 0
      %p136 = por %p134, %p135
      %p137 = scmp.le.s32.totalorder 1, %s16
      %p138 = scmp.lt.s32.totalorder %s16, 3
      %p139 = pnand %p137, %p138
      %p140 = pneg %p139
      // Predicated region
      $region9: #{tpu_custom_call.1} parent=5 // pred_check
        _
      $region10: #{tpu_custom_call.1} parent=5 // pred_check_branch
        %142 = sbr.rel (%p139) target = $region12
      $region11: #{tpu_custom_call.1} parent=5 // pred_region
        %s143 = ssub.s32 %s16, 1
        // Predicated region
        $region13: #{tpu_custom_call.1} parent=11 // pred_check
          %p144 = pneg %p75
        $region14: #{tpu_custom_call.1} parent=11 // pred_check_branch
          %146 = sbr.rel (%p144) target = $region16
        $region15: #{tpu_custom_call.1} parent=11 // pred_region
          %148 = vsyncadd [#allocation7], 0
          %s149 = sshll.u32 %s1, 4
          %s150 = int_to_ptr.hbm [resolvable:$true] %s149
          %s151 = sshll.u32 [#allocation6], 4
          %s152 = int_to_ptr.vmem [resolvable:$true] %s151
          %157 = dma.hbm_to_vmem [thread:$0]  %s150, 1024, %s152, [#allocation7], 64, 64, 4
        $region16: #{tpu_custom_call.1} parent=11 // pred_fallthru
          _
        // Predicated region
        $region17: #{tpu_custom_call.1} parent=11 // pred_check
          %p158 = pneg %p101
        $region18: #{tpu_custom_call.1} parent=11 // pred_check_branch
          %160 = sbr.rel (%p158) target = $region20
        $region19: #{tpu_custom_call.1} parent=11 // pred_region
          %p161 = scmp.lt.s32.totalorder %s26, 0
          %s162 = scalar_select %p161, %s26, 0
          %s163 = scalar_lea.vmem %s2, %s162
        $region20: #{tpu_custom_call.1} parent=11 // pred_fallthru
          _
      $region12: #{tpu_custom_call.1} parent=5 // pred_fallthru
        _
      %p164 = scmp.lt.s32.totalorder %s16, 2
      // Predicated region
      $region21: #{tpu_custom_call.1} parent=5 // pred_check
        %p165 = pneg %p164
      $region22: #{tpu_custom_call.1} parent=5 // pred_check_branch
        %167 = sbr.rel (%p165) target = $region24
      $region23: #{tpu_custom_call.1} parent=5 // pred_region
        // Predicated region
        $region25: #{tpu_custom_call.1} parent=23 // pred_check
          %p168 = pneg %p48
        $region26: #{tpu_custom_call.1} parent=23 // pred_check_branch
          %170 = sbr.rel (%p168) target = $region28
        $region27: #{tpu_custom_call.1} parent=23 // pred_region
          %s171 = sand.u32 %s38, 1
          %s172 = scalar_lea.sflag [#allocation4], %s171
          %s173 = sand.u32 %s38, 1
          %s174 = smul.addr %s173, 8
          %s175 = scalar_lea.vmem [#allocation3], %s174
          %177 = vsyncadd %s172, 0
          %s178 = smul.addr %s23, 8
          %s179 = scalar_lea.hbm %s0, %s178
          %s181 = sshll.u32 %s179, 4
          %s182 = int_to_ptr.hbm [resolvable:$true] %s181
          %s183 = sshll.u32 %s175, 4
          %s184 = int_to_ptr.vmem [resolvable:$true] %s183
          %186 = dma.hbm_to_vmem [thread:$0]  %s182, 128, %s184, %s172
        $region28: #{tpu_custom_call.1} parent=23 // pred_fallthru
          _
      $region24: #{tpu_custom_call.1} parent=5 // pred_fallthru
        _
      %p187 = scmp.le.s32.totalorder 1, %s16
      %p188 = scmp.lt.s32.totalorder %s16, 3
      %p189 = pnand %p187, %p188
      %p190 = pneg %p189
      // Predicated region
      $region29: #{tpu_custom_call.1} parent=5 // pred_check
        _
      $region30: #{tpu_custom_call.1} parent=5 // pred_check_branch
        %192 = sbr.rel (%p189) target = $region32
      $region31: #{tpu_custom_call.1} parent=5 // pred_region
        %s193 = ssub.s32 %s16, 1
        %s194 = sand.u32 %s41, 1
        %s195 = scalar_lea.sflag [#allocation4], %s194
        %s196 = sand.u32 %s41, 1
        %s197 = smul.addr %s196, 8
        %s198 = scalar_lea.vmem [#allocation3], %s197
        // Predicated region
        $region33: #{tpu_custom_call.1} parent=31 // pred_check
          %p199 = pneg %p54
        $region34: #{tpu_custom_call.1} parent=31 // pred_check_branch
          %201 = sbr.rel (%p199) target = $region36
        $region35: #{tpu_custom_call.1} parent=31 // pred_region
          %203 = dma.done %s195, 128
        $region36: #{tpu_custom_call.1} parent=31 // pred_fallthru
          _
        // Predicated region
        $region37: #{tpu_custom_call.1} parent=31 // pred_check
          %p204 = pneg %p75
        $region38: #{tpu_custom_call.1} parent=31 // pred_check_branch
          %206 = sbr.rel (%p204) target = $region40
        $region39: #{tpu_custom_call.1} parent=31 // pred_region
          %208 = dma.done [#allocation7], 1024
        $region40: #{tpu_custom_call.1} parent=31 // pred_fallthru
          _
        %s209 = sand.u32 %s41, 1
        %s210 = scalar_lea.sflag [#allocation4], %s209
        %s211 = sand.u32 %s41, 1
        %s212 = smul.addr %s211, 8
        %s213 = scalar_lea.vmem [#allocation3], %s212
        %p214 = pneg %p54
        %p215 = pneg %p51
        %p216 = pneg %p75
        %p217 = pneg %p72
        %p218 = scmp.lt.s32.totalorder %s26, 0
        %s219 = scalar_select %p218, %s26, 0
        %s220 = scalar_lea.vmem %s2, %s219
        %p221 = pneg %p101
        %p222 = pneg %p98
        %p223 = pneg %p129
        %p224 = pneg %p126
        %s225 = sand.u32 %s116, 1
        %s226 = scalar_lea.sflag [#allocation5], %s225
        %s227 = sand.u32 %s116, 1
        %s228 = smul.addr %s227, 8
        %s229 = scalar_lea.vmem [#allocation8], %s228
        %p230 = scmp.lt.s32.totalorder %s26, 0
        %s231 = scalar_select %p230, %s26, 0
        %s232 = scalar_lea.vmem %s2, %s231
        %p233 = scmp.eq.s32.totalorder %s26, 0
        // Predicated region
        $region41: #{tpu_custom_call.1} parent=31 // pred_check
          %p234 = pneg %p233
        $region42: #{tpu_custom_call.1} parent=31 // pred_check_branch
          %236 = sbr.rel (%p234) target = $region44
        $region43: #{tpu_custom_call.1} parent=31 // pred_region
          %v237 = vld [vmem:[%s198] sm:$0xff]
          %238 = vadd.xlane.f32.xlu0 %v237
          %v239 = vpop.xlane.xlu0 %238
          %v240 = vmul.f32 %v239, 0.0078125
          %v241 = vsub.f32 %v237, %v240
          %v242 = vmul.f32 %v241, %v241
          %243 = vadd.xlane.f32.xlu0 %v242
          %v244 = vpop.xlane.xlu0 %243
          %v245 = vmul.f32 %v244, 0.007874016
          %v246 = vrsqrt.pop %v245
          %v247 = vmul.f32 %v246, %v245
          %v248 = vmul.f32 %v247, %v246
          %v249 = vmul.f32 0.5, %v248
          %v250 = vsub.f32 1.5, %v249
          %v251 = vmul.f32 %v246, %v250
          %v252 = vmul.f32 %v245, %v251
          %vm253 = vcmp.eq.f32.partialorder %v245, inf
          %v254 = vsel %vm253, %v245, %v252
          %vm255 = vcmp.eq.f32.partialorder %v245, 0.0
          %v256 = vand.u32 %v245, 2147483648
          %v257 = vsel %vm255, %v256, %v254
          %v258 = vadd.f32 %v257, 1e-06
          %v259 = vrcp.pop %v258
          %v260 = vmul.f32 %v241, %v259
          %v261 = vpack.c.bf16 %v260, %v260
          %262 = vst [vmem:[#allocation2] sm:$0xf] %v261
        $region44: #{tpu_custom_call.1} parent=31 // pred_fallthru
          _
        %v263 = vld [vmem:[#allocation2] sm:$0xf]
        %v264 = vld [vmem:[#allocation6] sm:$0xf]
        %v265 = vld [vmem:[#allocation6 + $0x4] sm:$0xf]
        %v266 = vld [vmem:[#allocation6 + $0x8] sm:$0xf]
        %v267 = vld [vmem:[#allocation6 + $0xc] sm:$0xf]
        %v268 = vld [vmem:[#allocation6 + $0x10] sm:$0xf]
        %v269 = vld [vmem:[#allocation6 + $0x14] sm:$0xf]
        %v270 = vld [vmem:[#allocation6 + $0x18] sm:$0xf]
        %v271 = vld [vmem:[#allocation6 + $0x1c] sm:$0xf]
        %v272 = vld [vmem:[#allocation6 + $0x20] sm:$0xf]
        %v273 = vld [vmem:[#allocation6 + $0x24] sm:$0xf]
        %v274 = vld [vmem:[#allocation6 + $0x28] sm:$0xf]
        %v275 = vld [vmem:[#allocation6 + $0x2c] sm:$0xf]
        %v276 = vld [vmem:[#allocation6 + $0x30] sm:$0xf]
        %v277 = vld [vmem:[#allocation6 + $0x34] sm:$0xf]
        %v278 = vld [vmem:[#allocation6 + $0x38] sm:$0xf]
        %v279 = vld [vmem:[#allocation6 + $0x3c] sm:$0xf]
        %v280 = vld [vmem:[%s232] sm:$0x1]
        %v282 = vperm.slane %v280, 0
        %v300 = vunpack.c.l.b16 %v264
        %v301 = vunpack.c.l.b16 %v265
        %v302 = vunpack.c.l.b16 %v266
        %v303 = vunpack.c.l.b16 %v267
        %v304 = vunpack.c.l.b16 %v268
        %v305 = vunpack.c.l.b16 %v269
        %v306 = vunpack.c.l.b16 %v270
        %v307 = vunpack.c.l.b16 %v271
        %v308 = vunpack.c.l.b16 %v272
        %v309 = vunpack.c.l.b16 %v273
        %v310 = vunpack.c.l.b16 %v274
        %v311 = vunpack.c.l.b16 %v275
        %v312 = vunpack.c.l.b16 %v276
        %v313 = vunpack.c.l.b16 %v277
        %v314 = vunpack.c.l.b16 %v278
        %v315 = vunpack.c.l.b16 %v279
        %v316 = vpack.c.b16 %v301, %v300
        %v317 = vpack.c.b16 %v303, %v302
        %v318 = vpack.c.b16 %v305, %v304
        %v319 = vpack.c.b16 %v307, %v306
        %v320 = vpack.c.b16 %v309, %v308
        %v321 = vpack.c.b16 %v311, %v310
        %v322 = vpack.c.b16 %v313, %v312
        %v323 = vpack.c.b16 %v315, %v314
        %332 = vmatpush.bf16.msra.mxu0 %v323
        %333 = vmatpush.bf16.msra.mxu0 %v322
        %334 = vmatpush.bf16.msra.mxu0 %v321
        %335 = vmatpush.bf16.msra.mxu0 %v320
        %336 = vmatpush.bf16.msra.mxu0 %v319
        %337 = vmatpush.bf16.msra.mxu0 %v318
        %338 = vmatpush.bf16.msra.mxu0 %v317
        %339 = vmatpush.bf16.msra.mxu0 %v316
        %340 = vmatmul.bf16.gmra.mxu0 %v263
        %v341 = vpop.f32.mrf.mxu0
        %v342 = vadd.f32 %v282, %v341
        %v343 = vpop.f32.mrf.mxu0
        %344 = vdwg.mxu0
        %v345 = vld [vmem:[%s198] sm:$0xff]
        %v346 = vadd.f32 %v345, %v342
        %347 = vst [vmem:[%s229] sm:$0xff] %v346
        %s348 = sand.u32 %s116, 1
        %s349 = scalar_lea.sflag [#allocation5], %s348
        %s350 = sand.u32 %s116, 1
        %s351 = smul.addr %s350, 8
        %s352 = scalar_lea.vmem [#allocation8], %s351
        // Predicated region
        $region45: #{tpu_custom_call.1} parent=31 // pred_check
          %p353 = pneg %p126
        $region46: #{tpu_custom_call.1} parent=31 // pred_check_branch
          %355 = sbr.rel (%p353) target = $region48
        $region47: #{tpu_custom_call.1} parent=31 // pred_region
          %357 = vsyncadd %s349, 0
          %s358 = sadd.s32 %s26, %s25
          %s359 = smul.addr %s358, 8
          %s360 = scalar_lea.hbm %s3, %s359
          %s362 = sshll.u32 %s352, 4
          %s363 = int_to_ptr.vmem [resolvable:$true] %s362
          %s364 = sshll.u32 %s360, 4
          %s365 = int_to_ptr.hbm [resolvable:$true] %s364
          %367 = dma.vmem_to_hbm [thread:$0]  %s363, 128, %s365, %s349
        $region48: #{tpu_custom_call.1} parent=31 // pred_fallthru
          _
      $region32: #{tpu_custom_call.1} parent=5 // pred_fallthru
        _
      %p368 = scmp.le.s32.totalorder 2, %s16
      // Predicated region
      $region49: #{tpu_custom_call.1} parent=5 // pred_check
        %p369 = pneg %p368
      $region50: #{tpu_custom_call.1} parent=5 // pred_check_branch
        %371 = sbr.rel (%p369) target = $region52
      $region51: #{tpu_custom_call.1} parent=5 // pred_region
        %s372 = ssub.s32 %s16, 2
        // Predicated region
        $region53: #{tpu_custom_call.1} parent=51 // pred_check
          %p373 = pneg %p132
        $region54: #{tpu_custom_call.1} parent=51 // pred_check_branch
          %375 = sbr.rel (%p373) target = $region56
        $region55: #{tpu_custom_call.1} parent=51 // pred_region
          %s376 = sand.u32 %s117, 1
          %s377 = scalar_lea.sflag [#allocation5], %s376
          %s378 = sand.u32 %s117, 1
          %s379 = smul.addr %s378, 8
          %s380 = scalar_lea.vmem [#allocation8], %s379
          %382 = dma.done %s377, 128
        $region56: #{tpu_custom_call.1} parent=51 // pred_fallthru
          _
      $region52: #{tpu_custom_call.1} parent=5 // pred_fallthru
        _
    $region6: #{tpu_custom_call.1} parent=1 // loop_footer
      %s20 = sadd.s32 1, %s16
    $region7: #{tpu_custom_call.1} parent=1 // loop_footer_branch
      %15 = sbr.rel target = $region3
    $region8: #{tpu_custom_call.1} parent=1 // loop_exit
      _
    %383 = vsyncpa [#allocation4], 1
    %s384 = scalar_lea.sflag [#allocation4], 1
    %385 = vsyncpa %s384, 1
    %386 = vsyncpa [#allocation7], 1
    %387 = vsyncpa [#allocation5], 1
    %s388 = scalar_lea.sflag [#allocation5], 1
    %389 = vsyncpa %s388, 1

</llo_original>
